<compile_context>
chip_gen: v5e
topology: v5e:2x2
jax: 0.10.0
libtpu: 0.0.40
codegen_flags: <defaults>
</compile_context>

<pallas_src>
import jax
import jax.numpy as jnp
from jax.experimental import pallas as pl
from jax.experimental.pallas import tpu as pltpu


def _round_up(x, m):
    return (x + m - 1) // m * m


def _highway_kernel(x_ref, w_ref, b_ref, o_ref):
    ep = o_ref.shape[-1]                                 # padded embed size (mult of 128)
    x_f32 = x_ref[...]                                   # (TB, Ep) f32
    x_bf = x_f32.astype(jnp.bfloat16)                    # bf16 only for the MXU
    # Single fused matmul: columns [0:Ep) -> projection, [Ep:2Ep) -> gate.
    y = jnp.dot(x_bf, w_ref[...], preferred_element_type=jnp.float32) + b_ref[...]
    proj = jnp.maximum(y[:, :ep], 0.0)                   # relu   (f32, VPU)
    gate = jax.nn.sigmoid(y[:, ep:])                     # sigmoid (f32, EUP)
    # Highway mix in f32; x term uses the exact f32 input.
    o_ref[...] = (proj * gate + (1.0 - gate) * x_f32).astype(o_ref.dtype)


def highway_forward(x, w_proj, b_proj, w_gate, b_gate, *, block_batch=256):
    """x: (B, E) f32; w_*: (E, E) already transposed to (in, out); b_*: (E,)."""
    B, E = x.shape
    Ep = _round_up(E, 128)                               # lane-dense embed dim
    Bp8 = _round_up(B, 8)
    TB = min(block_batch, Bp8)                           # batch tile (sublane mult of 8)
    Bp = _round_up(B, TB)
    grid = (Bp // TB,)

    # Zero-pad activations and parameters into the lane-dense space.  Padded
    # weight rows/cols and bias entries are zero, so padded output columns are
    # exactly zero and valid columns are untouched; we slice the pads off below.
    xp = jnp.pad(x, ((0, Bp - B), (0, Ep - E)))
    wp = jnp.pad(w_proj, ((0, Ep - E), (0, Ep - E)))
    wg = jnp.pad(w_gate, ((0, Ep - E), (0, Ep - E)))
    w_fused = jnp.concatenate([wp, wg], axis=1).astype(jnp.bfloat16)   # (Ep, 2Ep) bf16
    b_fused = jnp.concatenate(
        [jnp.pad(b_proj, (0, Ep - E)), jnp.pad(b_gate, (0, Ep - E))]
    ).reshape(1, 2 * Ep).astype(jnp.float32)                           # (1, 2Ep) f32

    # VMEM budget (sized against v7x's 64 MiB physical VMEM):
    #   resident fused weight + bias (double-buffered by the pipeline),
    #   double-buffered x/out tiles, plus the f32 (TB, 2Ep) intermediates.
    vmem_est = (
        2 * (Ep * 2 * Ep * 2 + 2 * Ep * 4)     # weight (bf16) + bias (f32), 2 bufs
        + 2 * (TB * Ep * 4)                    # x tiles (f32), 2 bufs
        + 2 * (TB * Ep * 4)                    # out tiles (f32), 2 bufs
        + 4 * (TB * 2 * Ep * 4)                # y / proj / gate intermediates
        + (1 << 20)                            # slack
    )
    vmem_limit = min(max(vmem_est, 4 << 20), 48 << 20)

    flops = 2 * Bp * Ep * (2 * Ep)                       # one fused matmul
    bytes_accessed = xp.size * 4 + w_fused.size * 2 + b_fused.size * 4 + Bp * Ep * 4

    out_padded = pl.pallas_call(
        _highway_kernel,
        out_shape=jax.ShapeDtypeStruct((Bp, Ep), x.dtype),
        grid_spec=pltpu.PrefetchScalarGridSpec(
            num_scalar_prefetch=0,
            grid=grid,
            in_specs=[
                pl.BlockSpec((TB, Ep), lambda i: (i, 0)),        # x tile
                pl.BlockSpec((Ep, 2 * Ep), lambda i: (0, 0)),    # fused weight, resident
                pl.BlockSpec((1, 2 * Ep), lambda i: (0, 0)),     # fused bias, resident
            ],
            out_specs=pl.BlockSpec((TB, Ep), lambda i: (i, 0)),
        ),
        compiler_params=pltpu.CompilerParams(
            dimension_semantics=("parallel",),
            vmem_limit_bytes=vmem_limit,
        ),
        cost_estimate=pl.CostEstimate(
            flops=flops,
            transcendentals=Bp * Ep,            # sigmoid
            bytes_accessed=bytes_accessed,
        ),
    )(xp, w_fused, b_fused)

    return out_padded[:B, :E]


def highway_reference(x, w_proj, b_proj, w_gate, b_gate):
    proj = jax.nn.relu(x @ w_proj + b_proj)
    gate = jax.nn.sigmoid(x @ w_gate + b_gate)
    return proj * gate + (1.0 - gate) * x


if __name__ == "__main__":
    embed_size = 32
    batch = 8

    key = jax.random.PRNGKey(0)
    kx, kwp, kbp, kwg, kbg = jax.random.split(key, 5)

    # Deterministic "parameter init" mimicking nn.Linear's uniform(-1/sqrt(E), 1/sqrt(E)).
    bound = 1.0 / jnp.sqrt(embed_size)
    x = jax.random.normal(kx, (batch, embed_size), dtype=jnp.float32)
    # Stored as (in_features, out_features) == W^T of the PyTorch weight.
    w_proj = jax.random.uniform(kwp, (embed_size, embed_size), jnp.float32, -bound, bound)
    b_proj = jax.random.uniform(kbp, (embed_size,), jnp.float32, -bound, bound)
    w_gate = jax.random.uniform(kwg, (embed_size, embed_size), jnp.float32, -bound, bound)
    b_gate = jax.random.uniform(kbg, (embed_size,), jnp.float32, -bound, bound)

    out = highway_forward(x, w_proj, b_proj, w_gate, b_gate)
    out = jax.block_until_ready(out)

    ref = highway_reference(x, w_proj, b_proj, w_gate, b_gate)
    assert out.shape == (batch, embed_size)
    # bf16 matmul inputs (f32 accumulate) -> ~1e-2-level relative error vs the
    # pure-f32 reference, so the tolerance is loosened accordingly.
    assert jnp.allclose(out, ref, atol=5e-2, rtol=5e-2), "mismatch vs reference"

    print("KERNEL_OK")
</pallas_src>

<mosaic_0001>
module attributes {stable_mosaic.version = 11 : i64} {
  func.func @_highway_kernel(%arg0: i32, %arg1: memref<8x128xf32, #tpu.memory_space<vmem>>, %arg2: memref<128x256xbf16, #tpu.memory_space<vmem>>, %arg3: memref<1x256xf32, #tpu.memory_space<vmem>>, %arg4: memref<8x128xf32, #tpu.memory_space<vmem>>) attributes {dimension_semantics = [#tpu.dimension_semantics<parallel>], iteration_bounds = array<i64: 1>, scalar_prefetch = 0 : i64, scratch_operands = 0 : i64, tpu.core_type = #tpu.core_type<tc>, window_params = [{transform_indices = @transform_0, window_bounds = array<i64: 8, 128>}, {pipeline_mode = #tpu.pipeline_mode<synchronous>, transform_indices = @transform_1, window_bounds = array<i64: 128, 256>}, {pipeline_mode = #tpu.pipeline_mode<synchronous>, transform_indices = @transform_2, window_bounds = array<i64: 1, 256>}, {transform_indices = @transform_3, window_bounds = array<i64: 8, 128>}]} {
    %c0 = arith.constant 0 : index
    %c0_0 = arith.constant 0 : index
    %0 = vector.load %arg1[%c0, %c0_0] : memref<8x128xf32, #tpu.memory_space<vmem>>, vector<8x128xf32>
    %1 = arith.truncf %0 : vector<8x128xf32> to vector<8x128xbf16>
    %c0_1 = arith.constant 0 : index
    %c0_2 = arith.constant 0 : index
    %2 = vector.load %arg2[%c0_1, %c0_2] : memref<128x256xbf16, #tpu.memory_space<vmem>>, vector<128x256xbf16>
    %cst = arith.constant dense<0.000000e+00> : vector<8x256xf32>
    %3 = tpu.matmul %1, %2, %cst {dimension_numbers = #tpu.dot_dimension_numbers<[1], [0], [0], [1], [0, 0, 1, 1], [], []>} : vector<8x128xbf16>, vector<128x256xbf16>, vector<8x256xf32> -> vector<8x256xf32>
    %c0_3 = arith.constant 0 : index
    %c0_4 = arith.constant 0 : index
    %4 = vector.load %arg3[%c0_3, %c0_4] : memref<1x256xf32, #tpu.memory_space<vmem>>, vector<1x256xf32>
    %5 = vector.broadcast %4 : vector<1x256xf32> to vector<8x256xf32>
    %6 = arith.addf %3, %5 : vector<8x256xf32>
    %7 = vector.extract_strided_slice %6 {offsets = [0, 0], sizes = [8, 128], strides = [1, 1]} : vector<8x256xf32> to vector<8x128xf32>
    %cst_5 = arith.constant 0.000000e+00 : f32
    %8 = vector.broadcast %cst_5 : f32 to vector<8x128xf32>
    %9 = arith.maximumf %7, %8 : vector<8x128xf32>
    %10 = vector.extract_strided_slice %6 {offsets = [0, 128], sizes = [8, 128], strides = [1, 1]} : vector<8x256xf32> to vector<8x128xf32>
    %11 = arith.negf %10 : vector<8x128xf32>
    %12 = math.exp %11 : vector<8x128xf32>
    %cst_6 = arith.constant 1.000000e+00 : f32
    %13 = vector.broadcast %cst_6 : f32 to vector<8x128xf32>
    %14 = arith.addf %13, %12 : vector<8x128xf32>
    %15 = arith.divf %13, %14 : vector<8x128xf32>
    %16 = arith.mulf %9, %15 : vector<8x128xf32>
    %cst_7 = arith.constant 1.000000e+00 : f32
    %17 = vector.broadcast %cst_7 : f32 to vector<8x128xf32>
    %18 = arith.subf %17, %15 : vector<8x128xf32>
    %19 = arith.mulf %18, %0 : vector<8x128xf32>
    %20 = arith.addf %16, %19 : vector<8x128xf32>
    %c0_8 = arith.constant 0 : index
    %c0_9 = arith.constant 0 : index
    %21 = vector.load %arg4[%c0_8, %c0_9] : memref<8x128xf32, #tpu.memory_space<vmem>>, vector<8x128xf32>
    tpu.vector_store %arg4[%c0_8, %c0_9], %20 {strides = array<i32>} : memref<8x128xf32, #tpu.memory_space<vmem>>, vector<8x128xf32>,
    return
  }
  func.func @transform_0(%arg0: i32) -> (i32, i32) {
    %c0_i32 = arith.constant 0 : i32
    %c0_i32_0 = arith.constant 0 : i32
    return %arg0, %c0_i32 : i32, i32
  }
  func.func @transform_1(%arg0: i32) -> (i32, i32) {
    %c0_i32 = arith.constant 0 : i32
    %c0_i32_0 = arith.constant 0 : i32
    %c0_i32_1 = arith.constant 0 : i32
    return %c0_i32, %c0_i32_0 : i32, i32
  }
  func.func @transform_2(%arg0: i32) -> (i32, i32) {
    %c0_i32 = arith.constant 0 : i32
    %c0_i32_0 = arith.constant 0 : i32
    %c0_i32_1 = arith.constant 0 : i32
    return %c0_i32, %c0_i32_0 : i32, i32
  }
  func.func @transform_3(%arg0: i32) -> (i32, i32) {
    %c0_i32 = arith.constant 0 : i32
    %c0_i32_0 = arith.constant 0 : i32
    return %arg0, %c0_i32 : i32, i32
  }
}

</mosaic_0001>

<llo_original>
// kernel: tpu_custom_call.1
$region0: #{tpu_custom_call.1}
  #allocation0 [shape = 'u32[]', space=smem, size = 0x4, offset = 0x4, fixed_abs, tag = 'smem constant byte address 0x4 - core index']
  #allocation1 [shape = 'u32[72,128]{1,0:T(1,128)}', space=vmem, size = 0x9000, scoped, tag = 'internal scratch']
  %s0 = inlined_call_operand.hbm [shape: f32[8,128], index: 0, kind: input, shape index: {}]
  %s1 = inlined_call_operand.hbm [shape: bf16[128,256], index: 1, kind: input, shape index: {}]
  %s2 = inlined_call_operand.hbm [shape: f32[1,256], index: 2, kind: input, shape index: {}]
  %s3 = inlined_call_operand.hbm [shape: f32[8,128], index: 3, kind: output, shape index: {}]
  %s4 = sld [smem:[#allocation0]]
  $region34: #{tpu_custom_call.1} parent=0
    _
  %s6 = ssub.s32 1, %s4
  %s7 = scalar_select 0, %s6, %s4
  $region1: #{tpu_custom_call.1} parent=0
    #allocation2 [shape = 'u8[4096]{0}', space=vmem, size = 0x1000, scoped, tag = 'input window, operand 0, single buffered']
    #allocation3 [shape = 's32[1]{0}', space=sflag, size = 0x4, scoped, tag = 'scoped memory for tpu_custom_call.1']
    #allocation4 [shape = 's32[1]{0}', space=sflag, size = 0x4, scoped, tag = 'scoped memory for tpu_custom_call.1']
    #allocation5 [shape = 'u8[65536]{0}', space=vmem, size = 0x10000, scoped, tag = 'input window, operand 1, single buffered']
    #allocation6 [shape = 's32[1]{0}', space=sflag, size = 0x4, scoped, tag = 'scoped memory for tpu_custom_call.1']
    #allocation7 [shape = 'u8[1024]{0}', space=vmem, size = 0x400, scoped, tag = 'input window, operand 2, single buffered']
    #allocation8 [shape = 'u8[4096]{0}', space=vmem, size = 0x1000, scoped, tag = 'output window, operand 0, single buffered']
    %8 = vsyncpa [#allocation3], 0
    %9 = vsyncpa [#allocation6], 0
    %10 = vsyncpa [#allocation4], 0
    // Predicated region
    $region2: #{tpu_custom_call.1} parent=1 // pred_check
      _
    $region3: #{tpu_custom_call.1} parent=1 // pred_check_branch
      %12 = sbr.rel (0) target = $region5
    $region4: #{tpu_custom_call.1} parent=1 // pred_region
      %14 = vsyncadd [#allocation3], 0
      %s16 = sshll.u32 %s0, 4
      %s17 = int_to_ptr.hbm [resolvable:$true] %s16
      %s18 = sshll.u32 [#allocation2], 4
      %s19 = int_to_ptr.vmem [resolvable:$true] %s18
      %21 = dma.hbm_to_vmem [thread:$0]  %s17, 128, %s19, [#allocation3]
    $region5: #{tpu_custom_call.1} parent=1 // pred_fallthru
      _
    // Predicated region
    $region6: #{tpu_custom_call.1} parent=1 // pred_check
      _
    $region7: #{tpu_custom_call.1} parent=1 // pred_check_branch
      %23 = sbr.rel (0) target = $region9
    $region8: #{tpu_custom_call.1} parent=1 // pred_region
      %25 = vsyncadd [#allocation6], 0
      %s26 = sshll.u32 %s1, 4
      %s27 = int_to_ptr.hbm [resolvable:$true] %s26
      %s28 = sshll.u32 [#allocation5], 4
      %s29 = int_to_ptr.vmem [resolvable:$true] %s28
      %34 = dma.hbm_to_vmem [thread:$0]  %s27, 2048, %s29, [#allocation6], 128, 128, 8
    $region9: #{tpu_custom_call.1} parent=1 // pred_fallthru
      _
    // Predicated region
    $region10: #{tpu_custom_call.1} parent=1 // pred_check
      _
    $region11: #{tpu_custom_call.1} parent=1 // pred_check_branch
      %36 = sbr.rel (0) target = $region13
    $region12: #{tpu_custom_call.1} parent=1 // pred_region
      %38 = vsyncadd [#allocation6], 0
      %s40 = sshll.u32 %s2, 4
      %s41 = int_to_ptr.hbm [resolvable:$true] %s40
      %s42 = sshll.u32 [#allocation7], 4
      %s43 = int_to_ptr.vmem [resolvable:$true] %s42
      %45 = dma.hbm_to_vmem [thread:$0]  %s41, 32, %s43, [#allocation6]
    $region13: #{tpu_custom_call.1} parent=1 // pred_fallthru
      _
    // Predicated region
    $region14: #{tpu_custom_call.1} parent=1 // pred_check
      _
    $region15: #{tpu_custom_call.1} parent=1 // pred_check_branch
      %47 = sbr.rel (0) target = $region17
    $region16: #{tpu_custom_call.1} parent=1 // pred_region
      %49 = dma.done [#allocation3], 128
    $region17: #{tpu_custom_call.1} parent=1 // pred_fallthru
      _
    // Predicated region
    $region18: #{tpu_custom_call.1} parent=1 // pred_check
      _
    $region19: #{tpu_custom_call.1} parent=1 // pred_check_branch
      %51 = sbr.rel (0) target = $region21
    $region20: #{tpu_custom_call.1} parent=1 // pred_region
      %53 = dma.done [#allocation6], 2048
    $region21: #{tpu_custom_call.1} parent=1 // pred_fallthru
      _
    // Predicated region
    $region22: #{tpu_custom_call.1} parent=1 // pred_check
      _
    $region23: #{tpu_custom_call.1} parent=1 // pred_check_branch
      %55 = sbr.rel (0) target = $region25
    $region24: #{tpu_custom_call.1} parent=1 // pred_region
      %57 = dma.done [#allocation6], 32
    $region25: #{tpu_custom_call.1} parent=1 // pred_fallthru
      _
    %v58 = vld [vmem:[#allocation2] sm:$0xff]
    %v59 = vpack.c.bf16 %v58, %v58
    %v60 = vld [vmem:[#allocation5] sm:$0xff]
    %v61 = vld [vmem:[#allocation5 + $0x8] sm:$0xff]
    %v62 = vld [vmem:[#allocation5 + $0x10] sm:$0xff]
    %v63 = vld [vmem:[#allocation5 + $0x18] sm:$0xff]
    %v64 = vld [vmem:[#allocation5 + $0x20] sm:$0xff]
    %v65 = vld [vmem:[#allocation5 + $0x28] sm:$0xff]
    %v66 = vld [vmem:[#allocation5 + $0x30] sm:$0xff]
    %v67 = vld [vmem:[#allocation5 + $0x38] sm:$0xff]
    %v68 = vld [vmem:[#allocation5 + $0x40] sm:$0xff]
    %v69 = vld [vmem:[#allocation5 + $0x48] sm:$0xff]
    %v70 = vld [vmem:[#allocation5 + $0x50] sm:$0xff]
    %v71 = vld [vmem:[#allocation5 + $0x58] sm:$0xff]
    %v72 = vld [vmem:[#allocation5 + $0x60] sm:$0xff]
    %v73 = vld [vmem:[#allocation5 + $0x68] sm:$0xff]
    %v74 = vld [vmem:[#allocation5 + $0x70] sm:$0xff]
    %v75 = vld [vmem:[#allocation5 + $0x78] sm:$0xff]
    %v76 = vld [vmem:[#allocation7] sm:$0x3]
    %v78 = vperm.slane %v76, 0
    %v79 = vperm.slane %v76, 1
    %v98 = vunpack.c.l.b16 %v60
    %v99 = vunpack.c.h.b16 %v60
    %v100 = vunpack.c.l.b16 %v61
    %v101 = vunpack.c.h.b16 %v61
    %v102 = vunpack.c.l.b16 %v62
    %v103 = vunpack.c.h.b16 %v62
    %v104 = vunpack.c.l.b16 %v63
    %v105 = vunpack.c.h.b16 %v63
    %v106 = vunpack.c.l.b16 %v64
    %v107 = vunpack.c.h.b16 %v64
    %v108 = vunpack.c.l.b16 %v65
    %v109 = vunpack.c.h.b16 %v65
    %v110 = vunpack.c.l.b16 %v66
    %v111 = vunpack.c.h.b16 %v66
    %v112 = vunpack.c.l.b16 %v67
    %v113 = vunpack.c.h.b16 %v67
    %v114 = vunpack.c.l.b16 %v68
    %v115 = vunpack.c.h.b16 %v68
    %v116 = vunpack.c.l.b16 %v69
    %v117 = vunpack.c.h.b16 %v69
    %v118 = vunpack.c.l.b16 %v70
    %v119 = vunpack.c.h.b16 %v70
    %v120 = vunpack.c.l.b16 %v71
    %v121 = vunpack.c.h.b16 %v71
    %v122 = vunpack.c.l.b16 %v72
    %v123 = vunpack.c.h.b16 %v72
    %v124 = vunpack.c.l.b16 %v73
    %v125 = vunpack.c.h.b16 %v73
    %v126 = vunpack.c.l.b16 %v74
    %v127 = vunpack.c.h.b16 %v74
    %v128 = vunpack.c.l.b16 %v75
    %v129 = vunpack.c.h.b16 %v75
    %v130 = vpack.c.b16 %v100, %v98
    %v131 = vpack.c.b16 %v101, %v99
    %v132 = vpack.c.b16 %v104, %v102
    %v133 = vpack.c.b16 %v105, %v103
    %v134 = vpack.c.b16 %v108, %v106
    %v135 = vpack.c.b16 %v109, %v107
    %v136 = vpack.c.b16 %v112, %v110
    %v137 = vpack.c.b16 %v113, %v111
    %v138 = vpack.c.b16 %v116, %v114
    %v139 = vpack.c.b16 %v117, %v115
    %v140 = vpack.c.b16 %v120, %v118
    %v141 = vpack.c.b16 %v121, %v119
    %v142 = vpack.c.b16 %v124, %v122
    %v143 = vpack.c.b16 %v125, %v123
    %v144 = vpack.c.b16 %v128, %v126
    %v145 = vpack.c.b16 %v129, %v127
    %162 = vmatpush.bf16.msra.mxu0 %v144
    %163 = vmatpush.bf16.msra.mxu0 %v142
    %164 = vmatpush.bf16.msra.mxu0 %v140
    %165 = vmatpush.bf16.msra.mxu0 %v138
    %166 = vmatpush.bf16.msra.mxu0 %v136
    %167 = vmatpush.bf16.msra.mxu0 %v134
    %168 = vmatpush.bf16.msra.mxu0 %v132
    %169 = vmatpush.bf16.msra.mxu0 %v130
    %170 = vmatmul.bf16.gmra.mxu0 %v59
    %v171 = vpop.f32.mrf.mxu0
    %v172 = vadd.f32 %v78, %v171
    %v173 = vpop.f32.mrf.mxu0
    %174 = vdwg.mxu0
    %175 = vmatpush.bf16.msra.mxu0 %v145
    %176 = vmatpush.bf16.msra.mxu0 %v143
    %177 = vmatpush.bf16.msra.mxu0 %v141
    %178 = vmatpush.bf16.msra.mxu0 %v139
    %179 = vmatpush.bf16.msra.mxu0 %v137
    %180 = vmatpush.bf16.msra.mxu0 %v135
    %181 = vmatpush.bf16.msra.mxu0 %v133
    %182 = vmatpush.bf16.msra.mxu0 %v131
    %183 = vmatmul.bf16.gmra.mxu0 %v59
    %v184 = vpop.f32.mrf.mxu0
    %v185 = vadd.f32 %v79, %v184
    %v186 = vpop.f32.mrf.mxu0
    %187 = vdwg.mxu0
    %v188 = vmax.f32 %v172, 0.0
    %v189 = vxor.u32 %v185, 2147483648
    %v190 = vmul.f32 %v189, 1.442695
    %v191 = vpow.pop %v190
    %v192 = vadd.f32 %v191, 1.0
    %v193 = vrcp.pop %v192
    %v194 = vmul.f32 %v192, %v193
    %v195 = vsub.f32 1.0, %v194
    %v196 = vmul.f32 %v193, %v195
    %v197 = vadd.f32 %v193, %v196
    %vm198 = vweird.f32 %v192
    %vm199 = vweird.f32 %v193
    %vm200 = vmor %vm198, %vm199
    %v201 = vsel %vm200, %v193, %v197
    %v202 = vand.u32 2147483647, %v192
    %vm203 = vcmp.eq.f32.partialorder %v202, 8.507059e+37
    %v204 = vand.u32 %v192, 2147483648
    %v205 = vor.u32 1.1754944e-38, %v204
    %v206 = vsel %vm203, %v205, %v201
    %v207 = vmul.f32 1.0, %v206
    %v208 = vmul.f32 %v188, %v207
    %v209 = vsub.f32 1.0, %v207
    %v210 = vmul.f32 %v209, %v58
    %v211 = vadd.f32 %v208, %v210
    %212 = vst [vmem:[#allocation8] sm:$0xff] %v211
    // Predicated region
    $region26: #{tpu_custom_call.1} parent=1 // pred_check
      _
    $region27: #{tpu_custom_call.1} parent=1 // pred_check_branch
      %214 = sbr.rel (0) target = $region29
    $region28: #{tpu_custom_call.1} parent=1 // pred_region
      %216 = vsyncadd [#allocation4], 0
      %s218 = sshll.u32 [#allocation8], 4
      %s219 = int_to_ptr.vmem [resolvable:$true] %s218
      %s220 = sshll.u32 %s3, 4
      %s221 = int_to_ptr.hbm [resolvable:$true] %s220
      %223 = dma.vmem_to_hbm [thread:$0]  %s219, 128, %s221, [#allocation4]
    $region29: #{tpu_custom_call.1} parent=1 // pred_fallthru
      _
    // Predicated region
    $region30: #{tpu_custom_call.1} parent=1 // pred_check
      _
    $region31: #{tpu_custom_call.1} parent=1 // pred_check_branch
      %225 = sbr.rel (0) target = $region33
    $region32: #{tpu_custom_call.1} parent=1 // pred_region
      %227 = dma.done [#allocation4], 128
    $region33: #{tpu_custom_call.1} parent=1 // pred_fallthru
      _
    %228 = vsyncpa [#allocation3], 1
    %229 = vsyncpa [#allocation6], 1
    %230 = vsyncpa [#allocation4], 1

</llo_original>
